<compile_context>
chip_gen: v7x
topology: tpu7x:2x2x1
jax: 0.10.0
libtpu: 0.0.40
codegen_flags: <defaults>
</compile_context>

<pallas_src>
import math
import functools

import numpy as np
import jax
import jax.numpy as jnp
from jax.experimental import pallas as pl
from jax.experimental.pallas import tpu as pltpu


def _pos_enc_kernel(seed_ref, pe_ref, x_ref, out_ref, *,
                    dropout_rate: float, apply_dropout: bool):
    # pe_ref : (1, N+1, D)  -- row 0 already contains cls_token + pe[0]
    # x_ref  : (TB, N, D)
    # out_ref: (TB, N+1, D)
    tb, n, d = x_ref.shape
    dtype = out_ref.dtype

    # Assemble the full output tile in registers: row 0 <- fused cls+pe row,
    # rows 1..N <- x + pe[1:].  One concat, one store.
    row0 = jnp.broadcast_to(pe_ref[:, 0:1, :], (tb, 1, d))
    body = x_ref[...] + pe_ref[:, 1:, :]
    y = jnp.concatenate([row0, body], axis=1)

    if apply_dropout and dropout_rate > 0.0:
        # Inverted dropout.  Per-element random bits come from a splitmix-style
        # integer hash of (seed, grid step, element index): pure vector int ops,
        # so it lowers on TPU Mosaic *and* in interpret mode.
        # TODO(synk): distributionally equivalent to nn.Dropout in train mode,
        # but not bit-exact with torch's RNG stream.
        shape = y.shape
        b_idx = jax.lax.broadcasted_iota(jnp.int32, shape, 0)
        s_idx = jax.lax.broadcasted_iota(jnp.int32, shape, 1)
        d_idx = jax.lax.broadcasted_iota(jnp.int32, shape, 2)
        idx = (b_idx * jnp.int32(shape[1] * shape[2])
               + s_idx * jnp.int32(shape[2]) + d_idx).astype(jnp.uint32)

        base = (seed_ref[0].astype(jnp.uint32)
                + pl.program_id(0).astype(jnp.uint32) * jnp.uint32(0x9E3779B9))
        h = base + idx * jnp.uint32(0x9E3779B9)
        h = (h ^ (h >> 16)) * jnp.uint32(0x7FEB352D)
        h = (h ^ (h >> 15)) * jnp.uint32(0x846CA68B)
        h = h ^ (h >> 16)

        # Compare in the top 31 bits (signed-safe on all backends).
        bits = (h >> 1).astype(jnp.int32)                 # in [0, 2^31)
        threshold = jnp.int32(int(dropout_rate * 2147483648.0))
        keep = bits >= threshold
        scale = jnp.asarray(1.0 / (1.0 - dropout_rate), dtype=dtype)
        y = jnp.where(keep, y * scale, jnp.zeros_like(y))

    out_ref[...] = y.astype(dtype)                        # single full-tile store


def positional_encoding_forward(x, cls_token, pe, *, dropout_rate=0.0,
                                deterministic=True, seed=0, block_b=8):
    """x: (B, N, D); cls_token: (1, 1, D); pe: (1, seq_len, D), seq_len >= N+1."""
    B, N, D = x.shape
    s = N + 1

    # Glue: slice PE to the used length, cast to x.dtype, and fold the
    # batch-constant cls token into row 0 (removes one kernel input + add).
    pe_sl = pe[:, :s, :].astype(x.dtype)
    pe_fused = pe_sl.at[:, 0:1, :].add(cls_token.astype(x.dtype))

    # Batch tile: largest divisor of B that is <= block_b (keeps blocks full;
    # sized small enough to fit v5e's 16 MiB scoped VMEM at ViT-scale D).
    tb = min(block_b, B)
    while B % tb != 0:
        tb -= 1
    grid_b = B // tb

    kernel = functools.partial(
        _pos_enc_kernel,
        dropout_rate=float(dropout_rate),
        apply_dropout=(not deterministic),
    )
    seed_arr = jnp.asarray([seed], dtype=jnp.int32)

    # NOTE: for real ViT d_model (e.g. 768) the output last dim is lane-dense
    # (multiple of 128); the demo D=32 emits masked stores, which is acceptable
    # at this scale.
    return pl.pallas_call(
        kernel,
        out_shape=jax.ShapeDtypeStruct((B, s, D), x.dtype),
        grid_spec=pltpu.PrefetchScalarGridSpec(
            num_scalar_prefetch=1,                  # dropout seed lives in SMEM
            grid=(grid_b,),
            in_specs=[
                pl.BlockSpec((1, s, D), lambda b, seed: (0, 0, 0)),    # fused pe
                pl.BlockSpec((tb, N, D), lambda b, seed: (b, 0, 0)),   # x
            ],
            out_specs=pl.BlockSpec((tb, s, D), lambda b, seed: (b, 0, 0)),
        ),
        compiler_params=pltpu.CompilerParams(
            dimension_semantics=("parallel",)),     # shard batch across TCs (v7x)
    )(seed_arr, pe_fused, x)


def make_sinusoidal_pe(seq_len: int, d_model: int):
    """Exactly mirrors the PyTorch buffer construction in __init__."""
    position = np.arange(seq_len, dtype=np.float32)[:, None]
    div_term = np.exp(np.arange(0, d_model, 2, dtype=np.float32)
                      * (-math.log(10000.0) / d_model))
    pe = np.zeros((seq_len, d_model), dtype=np.float32)
    pe[:, 0::2] = np.sin(position * div_term)
    pe[:, 1::2] = np.cos(position * div_term)
    return jnp.asarray(pe)[None]  # (1, seq_len, d_model)


def reference_forward(x, cls_token, pe):
    """Pure-JAX reference of the PyTorch forward (eval mode / no dropout)."""
    B = x.shape[0]
    cls = jnp.broadcast_to(cls_token, (B, 1, x.shape[2]))
    y = jnp.concatenate([cls, x], axis=1)
    return y + pe[:, :y.shape[1], :]


if __name__ == "__main__":
    # Small shapes consistent with the module: d_model=32, 8 patch tokens,
    # seq_len buffer = 9 (cls + patches), batch=2, dropout p=0.1.
    B, N, D = 2, 8, 32
    SEQ_LEN = N + 1
    DROPOUT = 0.1

    key = jax.random.PRNGKey(0)
    k_cls, k_x = jax.random.split(key)

    cls_token = jax.random.normal(k_cls, (1, 1, D), dtype=jnp.float32)
    pe = make_sinusoidal_pe(SEQ_LEN, D)
    x = jax.random.normal(k_x, (B, N, D), dtype=jnp.float32)

    ref = reference_forward(x, cls_token, pe)

    # Eval-mode path (dropout is identity) — check against pure-JAX reference.
    out_eval = positional_encoding_forward(
        x, cls_token, pe, dropout_rate=DROPOUT, deterministic=True)
    out_eval = jax.block_until_ready(out_eval)
    assert out_eval.shape == (B, SEQ_LEN, D)
    np.testing.assert_allclose(np.asarray(out_eval), np.asarray(ref),
                               rtol=1e-6, atol=1e-6)

    # Train-mode path (fused in-kernel dropout) — run + sanity checks.
    out_train = positional_encoding_forward(
        x, cls_token, pe, dropout_rate=DROPOUT, deterministic=False, seed=123)
    out_train = jax.block_until_ready(out_train)
    assert out_train.shape == (B, SEQ_LEN, D)

    out_np = np.asarray(out_train)
    ref_np = np.asarray(ref)
    zero_frac = float(np.mean(out_np == 0.0))
    assert 0.0 < zero_frac < 0.5, f"unexpected dropout zero fraction {zero_frac}"
    # Surviving elements must equal reference * 1/(1-p).
    nz = out_np != 0.0
    np.testing.assert_allclose(out_np[nz], ref_np[nz] / (1.0 - DROPOUT),
                               rtol=1e-5, atol=1e-5)

    print("KERNEL_OK")
</pallas_src>

<mosaic_0001>
module attributes {stable_mosaic.version = 11 : i64} {
  func.func @_pos_enc_kernel(%arg0: i32, %arg1: memref<1xi32, #tpu.memory_space<smem>>, %arg2: memref<1x9x32xf32, #tpu.memory_space<vmem>>, %arg3: memref<2x8x32xf32, #tpu.memory_space<vmem>>, %arg4: memref<2x9x32xf32, #tpu.memory_space<vmem>>) attributes {dimension_semantics = [#tpu.dimension_semantics<parallel>], iteration_bounds = array<i64: 1>, scalar_prefetch = 1 : i64, scratch_operands = 0 : i64, tpu.core_type = #tpu.core_type<tc>, window_params = [{pipeline_mode = #tpu.pipeline_mode<synchronous>, transform_indices = @transform_0, window_bounds = array<i64: 1, 9, 32>}, {transform_indices = @transform_1, window_bounds = array<i64: 2, 8, 32>}, {transform_indices = @transform_2, window_bounds = array<i64: 2, 9, 32>}]} {
    %c0 = arith.constant 0 : index
    %c0_0 = arith.constant 0 : index
    %c0_1 = arith.constant 0 : index
    %0 = vector.load %arg2[%c0, %c0_0, %c0_1] : memref<1x9x32xf32, #tpu.memory_space<vmem>>, vector<1x1x32xf32>
    %1 = vector.shape_cast %0 : vector<1x1x32xf32> to vector<1x1x32xf32>
    %2 = vector.broadcast %1 : vector<1x1x32xf32> to vector<2x1x32xf32>
    %c0_2 = arith.constant 0 : index
    %c0_3 = arith.constant 0 : index
    %c0_4 = arith.constant 0 : index
    %3 = vector.load %arg3[%c0_2, %c0_3, %c0_4] : memref<2x8x32xf32, #tpu.memory_space<vmem>>, vector<2x8x32xf32>
    %c0_5 = arith.constant 0 : index
    %c1 = arith.constant 1 : index
    %c0_6 = arith.constant 0 : index
    %4 = vector.load %arg2[%c0_5, %c1, %c0_6] : memref<1x9x32xf32, #tpu.memory_space<vmem>>, vector<1x8x32xf32>
    %5 = vector.broadcast %4 : vector<1x8x32xf32> to vector<2x8x32xf32>
    %6 = arith.addf %3, %5 : vector<2x8x32xf32>
    %7 = tpu.concatenate %2, %6 in 1 : vector<2x1x32xf32>, vector<2x8x32xf32> -> vector<2x9x32xf32>
    %c0_7 = arith.constant 0 : index
    %c0_8 = arith.constant 0 : index
    %c0_9 = arith.constant 0 : index
    %8 = vector.load %arg4[%c0_7, %c0_8, %c0_9] : memref<2x9x32xf32, #tpu.memory_space<vmem>>, vector<2x9x32xf32>
    tpu.vector_store %arg4[%c0_7, %c0_8, %c0_9], %7 {strides = array<i32>} : memref<2x9x32xf32, #tpu.memory_space<vmem>>, vector<2x9x32xf32>,
    return
  }
  func.func @transform_0(%arg0: i32, %arg1: memref<1xi32, #tpu.memory_space<smem>>) -> (i32, i32, i32) {
    %c0_i32 = arith.constant 0 : i32
    %c0_i32_0 = arith.constant 0 : i32
    %c0_i32_1 = arith.constant 0 : i32
    %c0_i32_2 = arith.constant 0 : i32
    return %c0_i32, %c0_i32_0, %c0_i32_1 : i32, i32, i32
  }
  func.func @transform_1(%arg0: i32, %arg1: memref<1xi32, #tpu.memory_space<smem>>) -> (i32, i32, i32) {
    %c0_i32 = arith.constant 0 : i32
    %c0_i32_0 = arith.constant 0 : i32
    %c0_i32_1 = arith.constant 0 : i32
    return %arg0, %c0_i32, %c0_i32_0 : i32, i32, i32
  }
  func.func @transform_2(%arg0: i32, %arg1: memref<1xi32, #tpu.memory_space<smem>>) -> (i32, i32, i32) {
    %c0_i32 = arith.constant 0 : i32
    %c0_i32_0 = arith.constant 0 : i32
    %c0_i32_1 = arith.constant 0 : i32
    return %arg0, %c0_i32, %c0_i32_0 : i32, i32, i32
  }
}

</mosaic_0001>

<llo_original>
// kernel: tpu_custom_call.1
$region0: #{tpu_custom_call.1}
  #allocation0 [shape = 'u32[]', space=smem, size = 0x4, offset = 0x4, fixed_abs, tag = 'smem constant byte address 0x4 - core index']
  #allocation1 [shape = 'u32[144,128]{1,0:T(1,128)}', space=vmem, size = 0x12000, scoped, tag = 'internal scratch']
  #allocation2 [shape = 's32[1]{0}', space=sflag, size = 0x4, scoped, tag = 'scoped memory for tpu_custom_call.1']
  #allocation3 [shape = 's32[1]{0:T(128)S(6)}', space=smem, size = 0x200, scoped, tag = 'prefetched SMEM operand 0']
  %s0 = inlined_call_operand.<no memory space> [shape: s32[1], index: 0, kind: input, shape index: {}]
  %s1 = inlined_call_operand.vmem [shape: f32[1,9,32], index: 1, kind: input, shape index: {}]
  %s2 = inlined_call_operand.vmem [shape: f32[2,8,32], index: 2, kind: input, shape index: {}]
  %s3 = inlined_call_operand.vmem [shape: f32[2,9,32], index: 3, kind: output, shape index: {}]
  %s4 = sld [smem:[#allocation0]]
  $region18: #{tpu_custom_call.1} parent=0
    _
  %s6 = ssub.s32 1, %s4
  %s7 = scalar_select 0, %s6, %s4
  %8 = sst [smem:[#allocation3]] %s0
  // Predicated region
  $region2: #{tpu_custom_call.1} parent=0 // pred_check
    _
  $region3: #{tpu_custom_call.1} parent=0 // pred_check_branch
    %10 = sbr.rel (0) target = $region5
  $region4: #{tpu_custom_call.1} parent=0 // pred_region
    _
  $region5: #{tpu_custom_call.1} parent=0 // pred_fallthru
    _
  // Predicated region
  $region6: #{tpu_custom_call.1} parent=0 // pred_check
    _
  $region7: #{tpu_custom_call.1} parent=0 // pred_check_branch
    %12 = sbr.rel (0) target = $region9
  $region8: #{tpu_custom_call.1} parent=0 // pred_region
    _
  $region9: #{tpu_custom_call.1} parent=0 // pred_fallthru
    _
  %v13 = vld [vmem:[%s1] sm:$0x1]
  %v14 = vld [vmem:[%s2] sm:$0xff]
  %v15 = vld [vmem:[%s2 + $0x8] sm:$0xff]
  %v16 = vld [vmem:[%s1 + $0x1] sm:$0xff]
  %v17 = vadd.f32 %v14, %v16
  %v18 = vadd.f32 %v15, %v16
  %v21 = vrot.slane %v17, 7
  %v22 = vrot.slane %v18, 7
  %vm25 = vcmask 1040384
  %v26 = vsel %vm25, %v13, %v21
  %v27 = vsel %vm25, %v13, %v22
  %vm28 = vcmask 261120
  %29 = vst.msk [vmem:[%s3] sm:$0xff] %vm28, %v26
  %vm30 = vcmask 253952
  %31 = vst.msk [vmem:[%s3 + $0x8] sm:$0x1] %vm30, %v21
  %32 = vst.msk [vmem:[%s3 + $0x10] sm:$0xff] %vm28, %v27
  %33 = vst.msk [vmem:[%s3 + $0x18] sm:$0x1] %vm30, %v22
  // Predicated region
  $region10: #{tpu_custom_call.1} parent=0 // pred_check
    _
  $region11: #{tpu_custom_call.1} parent=0 // pred_check_branch
    %35 = sbr.rel (0) target = $region13
  $region12: #{tpu_custom_call.1} parent=0 // pred_region
    _
  $region13: #{tpu_custom_call.1} parent=0 // pred_fallthru
    _
  // Predicated region
  $region14: #{tpu_custom_call.1} parent=0 // pred_check
    _
  $region15: #{tpu_custom_call.1} parent=0 // pred_check_branch
    %37 = sbr.rel (0) target = $region17
  $region16: #{tpu_custom_call.1} parent=0 // pred_region
    _
  $region17: #{tpu_custom_call.1} parent=0 // pred_fallthru
    _

</llo_original>
